<compile_context>
chip_gen: v6e
topology: v6e:2x2x1
jax: 0.10.0
libtpu: 0.0.40
codegen_flags: <defaults>
</compile_context>

<pallas_src>
import math
import functools

import jax
import jax.numpy as jnp
from jax import lax
from jax.experimental import pallas as pl
from jax.experimental.pallas import tpu as pltpu

# ----------------------------- configuration --------------------------------
BATCH = 2
SEQ = 8            # num_tokens (== context_length here)
D_IN = 32
D_OUT = 32
NUM_HEADS = 4
HEAD_DIM = D_OUT // NUM_HEADS
DROPOUT_P = 0.0    # dropout is an exact identity at p=0 (matches eval / p=0 semantics)
LANE = 128         # TPU lane width; output projection is padded to this


# ------------------------------- kernel -------------------------------------
def mha_kernel(x_ref, wqkv_ref, wo_ref, bo_ref, o_ref,
               *, num_heads, head_dim, d_out):
    # x_ref:    (T, d_in)          tokens of ONE batch element (grid axis = batch)
    # wqkv_ref: (d_in, 3*d_out)    fused [Wq*scale | Wk | Wv]
    # wo_ref:   (d_out, d_pad)     lane-padded output projection weight
    # bo_ref:   (1, d_pad)         lane-padded output bias
    # o_ref:    (T, d_pad)         lane-dense output slab
    x = x_ref[...]                                                   # (T, d_in)
    t = x.shape[0]

    # Single fused QKV projection: one MXU push (q already scaled by 1/sqrt(hd)).
    qkv = jnp.dot(x, wqkv_ref[...], preferred_element_type=jnp.float32)  # (T, 3*d_out)

    # Plain causal mask for this batch element (no block-diagonal / int divide).
    row = lax.broadcasted_iota(jnp.int32, (t, t), 0)
    col = lax.broadcasted_iota(jnp.int32, (t, t), 1)
    keep = col <= row

    # Per-head attention. Static Python loop (unrolled at trace time); all 2-D ops,
    # so no 3-D transposes/reshapes of activations are needed.
    ctx_parts = []
    for h in range(num_heads):
        lo = h * head_dim
        hi = lo + head_dim
        q_h = qkv[:, lo:hi]                                          # (T, hd)
        k_h = qkv[:, d_out + lo: d_out + hi]                         # (T, hd)
        v_h = qkv[:, 2 * d_out + lo: 2 * d_out + hi]                 # (T, hd)

        s = jnp.einsum("td,sd->ts", q_h, k_h,
                       preferred_element_type=jnp.float32)           # (T, T)
        s = jnp.where(keep, s, -jnp.inf)

        # Numerically-stable softmax in f32 (exact reciprocal keeps 1e-5 tolerance;
        # the diagonal is always kept, so no fully-masked row -> no NaN).
        m = jnp.max(s, axis=-1, keepdims=True)
        p = jnp.exp(s - m)
        w = p * pl.reciprocal(jnp.sum(p, axis=-1, keepdims=True), approx=False)

        # TODO(synk): nonzero-p attention dropout (training mode) not implemented;
        # p = 0.0 here so dropout is an exact identity.

        ctx_parts.append(jnp.dot(w, v_h, preferred_element_type=jnp.float32))

    # Heads concatenated on the lane axis -> single K=d_out output projection.
    ctx = jnp.concatenate(ctx_parts, axis=-1)                        # (T, d_out)
    out = jnp.dot(ctx, wo_ref[...],
                  preferred_element_type=jnp.float32) + bo_ref[...]  # (T, d_pad)

    o_ref[...] = out.astype(o_ref.dtype)


# ------------------------------- wrapper -------------------------------------
def multi_head_attention(x, wq, wk, wv, wo, bo, *, num_heads=NUM_HEADS):
    b, t, d_in = x.shape
    d_out = wq.shape[1]
    head_dim = d_out // num_heads
    d_pad = ((d_out + LANE - 1) // LANE) * LANE
    scale = 1.0 / math.sqrt(head_dim)

    # Fused 2-D QKV weight (softmax scale folded into the query columns).
    wqkv = jnp.concatenate([wq * scale, wk, wv], axis=1)             # (d_in, 3*d_out)

    # Lane-padded output projection weight / bias (real d_out columns first).
    wo_p = jnp.zeros((d_out, d_pad), wo.dtype).at[:, :d_out].set(wo)
    bo_p = jnp.zeros((1, d_pad), bo.dtype).at[0, :d_out].set(bo)

    # (B, T, d_in) -> (B*T, d_in); each grid step owns one T-row slab.
    x2 = x.reshape(b * t, d_in)

    kernel = functools.partial(mha_kernel, num_heads=num_heads,
                               head_dim=head_dim, d_out=d_out)

    out = pl.pallas_call(
        kernel,
        out_shape=jax.ShapeDtypeStruct((b * t, d_pad), x.dtype),
        grid=(b,),
        in_specs=[
            pl.BlockSpec((t, d_in), lambda i: (i, 0)),                 # x (one batch elem)
            pl.BlockSpec((d_in, 3 * d_out), lambda i: (0, 0)),         # fused QKV weight
            pl.BlockSpec((d_out, d_pad), lambda i: (0, 0)),            # out_proj weight
            pl.BlockSpec((1, d_pad), lambda i: (0, 0)),                # out_proj bias
        ],
        out_specs=pl.BlockSpec((t, d_pad), lambda i: (i, 0)),
        compiler_params=pltpu.CompilerParams(
            dimension_semantics=("parallel",)),                        # v7x: shard over 2 TCs
    )(x2, wqkv, wo_p, bo_p)

    # Strip lane padding and restore (B, T, d_out).
    return out[:, :d_out].reshape(b, t, d_out)


# --------------------------- pure-JAX reference ------------------------------
def mha_reference(x, wq, wk, wv, wo, bo, num_heads, head_dim):
    b, t, _ = x.shape
    q = (x @ wq).reshape(b, t, num_heads, head_dim).transpose(0, 2, 1, 3)
    k = (x @ wk).reshape(b, t, num_heads, head_dim).transpose(0, 2, 1, 3)
    v = (x @ wv).reshape(b, t, num_heads, head_dim).transpose(0, 2, 1, 3)
    scores = q @ k.transpose(0, 1, 3, 2)
    mask = jnp.triu(jnp.ones((t, t), dtype=bool), k=1)
    scores = jnp.where(mask[None, None], -jnp.inf, scores)
    w = jax.nn.softmax(scores / math.sqrt(head_dim), axis=-1)
    ctx = (w @ v).transpose(0, 2, 1, 3).reshape(b, t, num_heads * head_dim)
    return ctx @ wo + bo


# --------------------------------- main ---------------------------------------
if __name__ == "__main__":
    key = jax.random.PRNGKey(0)
    kx, kq, kk, kv, ko, kb = jax.random.split(key, 6)

    x = jax.random.normal(kx, (BATCH, SEQ, D_IN), dtype=jnp.float32)

    # Deterministic parameter init (qkv_bias=False; out_proj has bias).
    wq = jax.random.normal(kq, (D_IN, D_OUT), dtype=jnp.float32) * 0.1
    wk = jax.random.normal(kk, (D_IN, D_OUT), dtype=jnp.float32) * 0.1
    wv = jax.random.normal(kv, (D_IN, D_OUT), dtype=jnp.float32) * 0.1
    wo = jax.random.normal(ko, (D_OUT, D_OUT), dtype=jnp.float32) * 0.1
    bo = jax.random.normal(kb, (D_OUT,), dtype=jnp.float32) * 0.1

    out = multi_head_attention(x, wq, wk, wv, wo, bo)
    out = jax.block_until_ready(out)

    ref = mha_reference(x, wq, wk, wv, wo, bo, NUM_HEADS, HEAD_DIM)
    assert out.shape == (BATCH, SEQ, D_OUT)
    assert jnp.allclose(out, ref, atol=1e-5, rtol=1e-5), "mismatch vs reference"

    print("KERNEL_OK")
</pallas_src>

<mosaic_0001>
module attributes {stable_mosaic.version = 11 : i64} {
  func.func @mha_kernel(%arg0: i32, %arg1: memref<8x32xf32, #tpu.memory_space<vmem>>, %arg2: memref<32x96xf32, #tpu.memory_space<vmem>>, %arg3: memref<32x128xf32, #tpu.memory_space<vmem>>, %arg4: memref<1x128xf32, #tpu.memory_space<vmem>>, %arg5: memref<8x128xf32, #tpu.memory_space<vmem>>) attributes {dimension_semantics = [#tpu.dimension_semantics<parallel>], iteration_bounds = array<i64: 2>, scalar_prefetch = 0 : i64, scratch_operands = 0 : i64, tpu.core_type = #tpu.core_type<tc>, window_params = [{transform_indices = @transform_0, window_bounds = array<i64: 8, 32>}, {pipeline_mode = #tpu.pipeline_mode<synchronous>, transform_indices = @transform_1, window_bounds = array<i64: 32, 96>}, {pipeline_mode = #tpu.pipeline_mode<synchronous>, transform_indices = @transform_2, window_bounds = array<i64: 32, 128>}, {pipeline_mode = #tpu.pipeline_mode<synchronous>, transform_indices = @transform_3, window_bounds = array<i64: 1, 128>}, {transform_indices = @transform_4, window_bounds = array<i64: 8, 128>}]} {
    %c0 = arith.constant 0 : index
    %c0_0 = arith.constant 0 : index
    %0 = vector.load %arg1[%c0, %c0_0] : memref<8x32xf32, #tpu.memory_space<vmem>>, vector<8x32xf32>
    %c0_1 = arith.constant 0 : index
    %c0_2 = arith.constant 0 : index
    %1 = vector.load %arg2[%c0_1, %c0_2] : memref<32x96xf32, #tpu.memory_space<vmem>>, vector<32x96xf32>
    %cst = arith.constant dense<0.000000e+00> : vector<8x96xf32>
    %2 = tpu.matmul %0, %1, %cst {dimension_numbers = #tpu.dot_dimension_numbers<[1], [0], [0], [1], [0, 0, 1, 1], [], []>} : vector<8x32xf32>, vector<32x96xf32>, vector<8x96xf32> -> vector<8x96xf32>
    %3 = tpu.iota {dimensions = array<i32: 0>} : vector<8x8xi32>
    %4 = tpu.iota {dimensions = array<i32: 1>} : vector<8x8xi32>
    %5 = arith.cmpi sle, %4, %3 : vector<8x8xi32>
    %6 = vector.extract_strided_slice %2 {offsets = [0, 0], sizes = [8, 8], strides = [1, 1]} : vector<8x96xf32> to vector<8x8xf32>
    %7 = vector.extract_strided_slice %2 {offsets = [0, 32], sizes = [8, 8], strides = [1, 1]} : vector<8x96xf32> to vector<8x8xf32>
    %8 = vector.extract_strided_slice %2 {offsets = [0, 64], sizes = [8, 8], strides = [1, 1]} : vector<8x96xf32> to vector<8x8xf32>
    "tpu.trace_start"() <{level = 10 : i32, message = "td,sd->ts"}> : () -> ()
    %cst_3 = arith.constant dense<0.000000e+00> : vector<8x8xf32>
    %9 = tpu.matmul %6, %7, %cst_3 {dimension_numbers = #tpu.dot_dimension_numbers<[1], [1], [0], [0], [0, 0, 1, 0], [], []>} : vector<8x8xf32>, vector<8x8xf32>, vector<8x8xf32> -> vector<8x8xf32>
    %cst_4 = arith.constant 0xFF800000 : f32
    "tpu.trace_stop"() : () -> ()
    %10 = vector.broadcast %cst_4 : f32 to vector<8x8xf32>
    %11 = arith.select %5, %9, %10 : vector<8x8xi1>, vector<8x8xf32>
    %cst_5 = arith.constant dense<0xFF800000> : vector<8xf32>
    %12 = vector.multi_reduction <maximumf>, %11, %cst_5 [1] : vector<8x8xf32> to vector<8xf32>
    %13 = vector.shape_cast %12 : vector<8xf32> to vector<8x1xf32>
    %14 = vector.broadcast %13 : vector<8x1xf32> to vector<8x8xf32>
    %15 = arith.subf %11, %14 : vector<8x8xf32>
    %16 = math.exp %15 : vector<8x8xf32>
    %cst_6 = arith.constant dense<0.000000e+00> : vector<8xf32>
    %17 = vector.multi_reduction <add>, %16, %cst_6 [1] : vector<8x8xf32> to vector<8xf32>
    %18 = vector.shape_cast %17 : vector<8xf32> to vector<8x1xf32>
    %19 = tpu.reciprocal %18 : vector<8x1xf32> -> vector<8x1xf32>
    %20 = vector.broadcast %19 : vector<8x1xf32> to vector<8x8xf32>
    %21 = arith.mulf %16, %20 : vector<8x8xf32>
    %cst_7 = arith.constant dense<0.000000e+00> : vector<8x8xf32>
    %22 = tpu.matmul %21, %8, %cst_7 {dimension_numbers = #tpu.dot_dimension_numbers<[1], [0], [0], [1], [0, 0, 1, 1], [], []>} : vector<8x8xf32>, vector<8x8xf32>, vector<8x8xf32> -> vector<8x8xf32>
    %23 = vector.extract_strided_slice %2 {offsets = [0, 8], sizes = [8, 8], strides = [1, 1]} : vector<8x96xf32> to vector<8x8xf32>
    %24 = vector.extract_strided_slice %2 {offsets = [0, 40], sizes = [8, 8], strides = [1, 1]} : vector<8x96xf32> to vector<8x8xf32>
    %25 = vector.extract_strided_slice %2 {offsets = [0, 72], sizes = [8, 8], strides = [1, 1]} : vector<8x96xf32> to vector<8x8xf32>
    "tpu.trace_start"() <{level = 10 : i32, message = "td,sd->ts"}> : () -> ()
    %cst_8 = arith.constant dense<0.000000e+00> : vector<8x8xf32>
    %26 = tpu.matmul %23, %24, %cst_8 {dimension_numbers = #tpu.dot_dimension_numbers<[1], [1], [0], [0], [0, 0, 1, 0], [], []>} : vector<8x8xf32>, vector<8x8xf32>, vector<8x8xf32> -> vector<8x8xf32>
    %cst_9 = arith.constant 0xFF800000 : f32
    "tpu.trace_stop"() : () -> ()
    %27 = vector.broadcast %cst_9 : f32 to vector<8x8xf32>
    %28 = arith.select %5, %26, %27 : vector<8x8xi1>, vector<8x8xf32>
    %cst_10 = arith.constant dense<0xFF800000> : vector<8xf32>
    %29 = vector.multi_reduction <maximumf>, %28, %cst_10 [1] : vector<8x8xf32> to vector<8xf32>
    %30 = vector.shape_cast %29 : vector<8xf32> to vector<8x1xf32>
    %31 = vector.broadcast %30 : vector<8x1xf32> to vector<8x8xf32>
    %32 = arith.subf %28, %31 : vector<8x8xf32>
    %33 = math.exp %32 : vector<8x8xf32>
    %cst_11 = arith.constant dense<0.000000e+00> : vector<8xf32>
    %34 = vector.multi_reduction <add>, %33, %cst_11 [1] : vector<8x8xf32> to vector<8xf32>
    %35 = vector.shape_cast %34 : vector<8xf32> to vector<8x1xf32>
    %36 = tpu.reciprocal %35 : vector<8x1xf32> -> vector<8x1xf32>
    %37 = vector.broadcast %36 : vector<8x1xf32> to vector<8x8xf32>
    %38 = arith.mulf %33, %37 : vector<8x8xf32>
    %cst_12 = arith.constant dense<0.000000e+00> : vector<8x8xf32>
    %39 = tpu.matmul %38, %25, %cst_12 {dimension_numbers = #tpu.dot_dimension_numbers<[1], [0], [0], [1], [0, 0, 1, 1], [], []>} : vector<8x8xf32>, vector<8x8xf32>, vector<8x8xf32> -> vector<8x8xf32>
    %40 = vector.extract_strided_slice %2 {offsets = [0, 16], sizes = [8, 8], strides = [1, 1]} : vector<8x96xf32> to vector<8x8xf32>
    %41 = vector.extract_strided_slice %2 {offsets = [0, 48], sizes = [8, 8], strides = [1, 1]} : vector<8x96xf32> to vector<8x8xf32>
    %42 = vector.extract_strided_slice %2 {offsets = [0, 80], sizes = [8, 8], strides = [1, 1]} : vector<8x96xf32> to vector<8x8xf32>
    "tpu.trace_start"() <{level = 10 : i32, message = "td,sd->ts"}> : () -> ()
    %cst_13 = arith.constant dense<0.000000e+00> : vector<8x8xf32>
    %43 = tpu.matmul %40, %41, %cst_13 {dimension_numbers = #tpu.dot_dimension_numbers<[1], [1], [0], [0], [0, 0, 1, 0], [], []>} : vector<8x8xf32>, vector<8x8xf32>, vector<8x8xf32> -> vector<8x8xf32>
    %cst_14 = arith.constant 0xFF800000 : f32
    "tpu.trace_stop"() : () -> ()
    %44 = vector.broadcast %cst_14 : f32 to vector<8x8xf32>
    %45 = arith.select %5, %43, %44 : vector<8x8xi1>, vector<8x8xf32>
    %cst_15 = arith.constant dense<0xFF800000> : vector<8xf32>
    %46 = vector.multi_reduction <maximumf>, %45, %cst_15 [1] : vector<8x8xf32> to vector<8xf32>
    %47 = vector.shape_cast %46 : vector<8xf32> to vector<8x1xf32>
    %48 = vector.broadcast %47 : vector<8x1xf32> to vector<8x8xf32>
    %49 = arith.subf %45, %48 : vector<8x8xf32>
    %50 = math.exp %49 : vector<8x8xf32>
    %cst_16 = arith.constant dense<0.000000e+00> : vector<8xf32>
    %51 = vector.multi_reduction <add>, %50, %cst_16 [1] : vector<8x8xf32> to vector<8xf32>
    %52 = vector.shape_cast %51 : vector<8xf32> to vector<8x1xf32>
    %53 = tpu.reciprocal %52 : vector<8x1xf32> -> vector<8x1xf32>
    %54 = vector.broadcast %53 : vector<8x1xf32> to vector<8x8xf32>
    %55 = arith.mulf %50, %54 : vector<8x8xf32>
    %cst_17 = arith.constant dense<0.000000e+00> : vector<8x8xf32>
    %56 = tpu.matmul %55, %42, %cst_17 {dimension_numbers = #tpu.dot_dimension_numbers<[1], [0], [0], [1], [0, 0, 1, 1], [], []>} : vector<8x8xf32>, vector<8x8xf32>, vector<8x8xf32> -> vector<8x8xf32>
    %57 = vector.extract_strided_slice %2 {offsets = [0, 24], sizes = [8, 8], strides = [1, 1]} : vector<8x96xf32> to vector<8x8xf32>
    %58 = vector.extract_strided_slice %2 {offsets = [0, 56], sizes = [8, 8], strides = [1, 1]} : vector<8x96xf32> to vector<8x8xf32>
    %59 = vector.extract_strided_slice %2 {offsets = [0, 88], sizes = [8, 8], strides = [1, 1]} : vector<8x96xf32> to vector<8x8xf32>
    "tpu.trace_start"() <{level = 10 : i32, message = "td,sd->ts"}> : () -> ()
    %cst_18 = arith.constant dense<0.000000e+00> : vector<8x8xf32>
    %60 = tpu.matmul %57, %58, %cst_18 {dimension_numbers = #tpu.dot_dimension_numbers<[1], [1], [0], [0], [0, 0, 1, 0], [], []>} : vector<8x8xf32>, vector<8x8xf32>, vector<8x8xf32> -> vector<8x8xf32>
    %cst_19 = arith.constant 0xFF800000 : f32
    "tpu.trace_stop"() : () -> ()
    %61 = vector.broadcast %cst_19 : f32 to vector<8x8xf32>
    %62 = arith.select %5, %60, %61 : vector<8x8xi1>, vector<8x8xf32>
    %cst_20 = arith.constant dense<0xFF800000> : vector<8xf32>
    %63 = vector.multi_reduction <maximumf>, %62, %cst_20 [1] : vector<8x8xf32> to vector<8xf32>
    %64 = vector.shape_cast %63 : vector<8xf32> to vector<8x1xf32>
    %65 = vector.broadcast %64 : vector<8x1xf32> to vector<8x8xf32>
    %66 = arith.subf %62, %65 : vector<8x8xf32>
    %67 = math.exp %66 : vector<8x8xf32>
    %cst_21 = arith.constant dense<0.000000e+00> : vector<8xf32>
    %68 = vector.multi_reduction <add>, %67, %cst_21 [1] : vector<8x8xf32> to vector<8xf32>
    %69 = vector.shape_cast %68 : vector<8xf32> to vector<8x1xf32>
    %70 = tpu.reciprocal %69 : vector<8x1xf32> -> vector<8x1xf32>
    %71 = vector.broadcast %70 : vector<8x1xf32> to vector<8x8xf32>
    %72 = arith.mulf %67, %71 : vector<8x8xf32>
    %cst_22 = arith.constant dense<0.000000e+00> : vector<8x8xf32>
    %73 = tpu.matmul %72, %59, %cst_22 {dimension_numbers = #tpu.dot_dimension_numbers<[1], [0], [0], [1], [0, 0, 1, 1], [], []>} : vector<8x8xf32>, vector<8x8xf32>, vector<8x8xf32> -> vector<8x8xf32>
    %74 = tpu.concatenate %22, %39, %56, %73 in 1 : vector<8x8xf32>, vector<8x8xf32>, vector<8x8xf32>, vector<8x8xf32> -> vector<8x32xf32>
    %c0_23 = arith.constant 0 : index
    %c0_24 = arith.constant 0 : index
    %75 = vector.load %arg3[%c0_23, %c0_24] : memref<32x128xf32, #tpu.memory_space<vmem>>, vector<32x128xf32>
    %cst_25 = arith.constant dense<0.000000e+00> : vector<8x128xf32>
    %76 = tpu.matmul %74, %75, %cst_25 {dimension_numbers = #tpu.dot_dimension_numbers<[1], [0], [0], [1], [0, 0, 1, 1], [], []>} : vector<8x32xf32>, vector<32x128xf32>, vector<8x128xf32> -> vector<8x128xf32>
    %c0_26 = arith.constant 0 : index
    %c0_27 = arith.constant 0 : index
    %77 = vector.load %arg4[%c0_26, %c0_27] : memref<1x128xf32, #tpu.memory_space<vmem>>, vector<1x128xf32>
    %78 = vector.broadcast %77 : vector<1x128xf32> to vector<8x128xf32>
    %79 = arith.addf %76, %78 : vector<8x128xf32>
    %c0_28 = arith.constant 0 : index
    %c0_29 = arith.constant 0 : index
    %80 = vector.load %arg5[%c0_28, %c0_29] : memref<8x128xf32, #tpu.memory_space<vmem>>, vector<8x128xf32>
    tpu.vector_store %arg5[%c0_28, %c0_29], %79 {strides = array<i32>} : memref<8x128xf32, #tpu.memory_space<vmem>>, vector<8x128xf32>,
    return
  }
  func.func @transform_0(%arg0: i32) -> (i32, i32) {
    %c0_i32 = arith.constant 0 : i32
    %c0_i32_0 = arith.constant 0 : i32
    return %arg0, %c0_i32 : i32, i32
  }
  func.func @transform_1(%arg0: i32) -> (i32, i32) {
    %c0_i32 = arith.constant 0 : i32
    %c0_i32_0 = arith.constant 0 : i32
    %c0_i32_1 = arith.constant 0 : i32
    return %c0_i32, %c0_i32_0 : i32, i32
  }
  func.func @transform_2(%arg0: i32) -> (i32, i32) {
    %c0_i32 = arith.constant 0 : i32
    %c0_i32_0 = arith.constant 0 : i32
    %c0_i32_1 = arith.constant 0 : i32
    return %c0_i32, %c0_i32_0 : i32, i32
  }
  func.func @transform_3(%arg0: i32) -> (i32, i32) {
    %c0_i32 = arith.constant 0 : i32
    %c0_i32_0 = arith.constant 0 : i32
    %c0_i32_1 = arith.constant 0 : i32
    return %c0_i32, %c0_i32_0 : i32, i32
  }
  func.func @transform_4(%arg0: i32) -> (i32, i32) {
    %c0_i32 = arith.constant 0 : i32
    %c0_i32_0 = arith.constant 0 : i32
    return %arg0, %c0_i32 : i32, i32
  }
}

</mosaic_0001>

<llo_original>
// kernel: tpu_custom_call.1
$region0: #{tpu_custom_call.1}
  #allocation0 [shape = 'u32[]', space=smem, size = 0x4, offset = 0x4, fixed_abs, tag = 'smem constant byte address 0x4 - core index']
  #allocation1 [shape = 'u32[144,128]{1,0:T(1,128)}', space=vmem, size = 0x12000, scoped, tag = 'internal scratch']
  %s0 = inlined_call_operand.hbm [shape: f32[16,32], index: 0, kind: input, shape index: {}]
  %s1 = inlined_call_operand.hbm [shape: f32[32,96], index: 1, kind: input, shape index: {}]
  %s2 = inlined_call_operand.hbm [shape: f32[32,128], index: 2, kind: input, shape index: {}]
  %s3 = inlined_call_operand.vmem [shape: f32[1,128], index: 3, kind: input, shape index: {}]
  %s4 = inlined_call_operand.hbm [shape: f32[16,128], index: 4, kind: output, shape index: {}]
  %s5 = sld [smem:[#allocation0]]
  $region61: #{tpu_custom_call.1} parent=0
    _
  %s7 = ssub.s32 1, %s5
  %s8 = scalar_select 0, %s7, %s5
  $region1: #{tpu_custom_call.1} parent=0
    #allocation2 [shape = 'u8[8192]{0}', space=vmem, size = 0x2000, scoped, tag = 'input window, operand 0']
    #allocation3 [shape = 's32[2]{0}', space=sflag, size = 0x8, scoped, tag = 'scoped memory for tpu_custom_call.1']
    #allocation4 [shape = 's32[2]{0}', space=sflag, size = 0x8, scoped, tag = 'scoped memory for tpu_custom_call.1']
    #allocation5 [shape = 'u8[16384]{0}', space=vmem, size = 0x4000, scoped, tag = 'input window, operand 1, single buffered']
    #allocation6 [shape = 's32[1]{0}', space=sflag, size = 0x4, scoped, tag = 'scoped memory for tpu_custom_call.1']
    #allocation7 [shape = 'u8[16384]{0}', space=vmem, size = 0x4000, scoped, tag = 'input window, operand 2, single buffered']
    #allocation8 [shape = 'u8[8192]{0}', space=vmem, size = 0x2000, scoped, tag = 'output window, operand 0']
    %9 = vsyncpa [#allocation3], 0
    %s10 = scalar_lea.sflag [#allocation3], 1
    %11 = vsyncpa %s10, 0
    %12 = vsyncpa [#allocation6], 0
    %13 = vsyncpa [#allocation4], 0
    %s14 = scalar_lea.sflag [#allocation4], 1
    %15 = vsyncpa %s14, 0
    loop: start=0, step=1, limit=4
    $region2: #{tpu_custom_call.1} parent=1 // loop_pre_header
      _
    $region3: #{tpu_custom_call.1} parent=1 // loop_header
      %s17 = sphi 0, %s21
      %p18 = scmp.ge.s32.totalorder %s17, 4
      %s27 = sphi 0, %s29
      %s30 = sphi 0, %s27
      %s31 = sphi 0, %s30
      %s47 = sphi 0, %s31
      %s51 = sphi 0, %s51
      %s53 = sphi 0, %s51
      %s54 = sphi 0, %s53
      %s68 = sphi 0, %s54
      %s72 = sphi 0, %s72
      %s74 = sphi 0, %s72
      %s75 = sphi 0, %s74
      %s89 = sphi 0, %s75
      %s93 = sphi 0, %s93
      %s95 = sphi 0, %s93
      %s96 = sphi 0, %s95
      %s110 = sphi 0, %s96
      %s116 = sphi 0, %s118
      %s119 = sphi 0, %s116
      %s120 = sphi 0, %s119
      %s136 = sphi 0, %s120
    $region4: #{tpu_custom_call.1} parent=1 // loop_header_branch
      %20 = sbr.rel (%p18) target = $region8
    $region5: #{tpu_custom_call.1} parent=1 // loop_body
      %s22 = ssub.s32 %s17, 1
      %s23 = ssub.s32 %s17, 2
      %s24 = sadd.s32 %s17, 1
      %s25 = ssub.s32 %s17, %s24
      %p26 = scmp.eq.s32.totalorder %s25, 0
      %s28 = sadd.s32 %s27, 1
      %s29 = scalar_select %p26, %s27, %s28
      %p32 = pneg %p26
      %p33 = scmp.eq.s32.totalorder %s17, 1
      %p34 = por %p32, %p33
      %p35 = scmp.ne.s32.totalorder %s27, %s30
      %p36 = scmp.eq.s32.totalorder %s17, 0
      %p37 = por %p35, %p36
      %p38 = scmp.ne.s32.totalorder %s27, %s30
      %p39 = scmp.eq.s32.totalorder %s22, 1
      %p40 = por %p38, %p39
      %p41 = scmp.ne.s32.totalorder %s30, %s31
      %p42 = scmp.eq.s32.totalorder %s22, 0
      %p43 = por %p41, %p42
      %p44 = scmp.ne.s32.totalorder %s30, %s31
      %p45 = scmp.eq.s32.totalorder %s23, 1
      %p46 = por %p44, %p45
      %p48 = scmp.ne.s32.totalorder %s31, %s47
      %p49 = scmp.eq.s32.totalorder %s23, 0
      %p50 = por %p48, %p49
      %s52 = sadd.s32 %s51, 1
      %p55 = scmp.eq.s32.totalorder %s17, 1
      %p56 = scmp.ne.s32.totalorder %s51, %s53
      %p57 = scmp.eq.s32.totalorder %s17, 0
      %p58 = por %p56, %p57
      %p59 = scmp.ne.s32.totalorder %s51, %s53
      %p60 = scmp.eq.s32.totalorder %s22, 1
      %p61 = por %p59, %p60
      %p62 = scmp.ne.s32.totalorder %s53, %s54
      %p63 = scmp.eq.s32.totalorder %s22, 0
      %p64 = por %p62, %p63
      %p65 = scmp.ne.s32.totalorder %s53, %s54
      %p66 = scmp.eq.s32.totalorder %s23, 1
      %p67 = por %p65, %p66
      %p69 = scmp.ne.s32.totalorder %s54, %s68
      %p70 = scmp.eq.s32.totalorder %s23, 0
      %p71 = por %p69, %p70
      %s73 = sadd.s32 %s72, 1
      %p76 = scmp.eq.s32.totalorder %s17, 1
      %p77 = scmp.ne.s32.totalorder %s72, %s74
      %p78 = scmp.eq.s32.totalorder %s17, 0
      %p79 = por %p77, %p78
      %p80 = scmp.ne.s32.totalorder %s72, %s74
      %p81 = scmp.eq.s32.totalorder %s22, 1
      %p82 = por %p80, %p81
      %p83 = scmp.ne.s32.totalorder %s74, %s75
      %p84 = scmp.eq.s32.totalorder %s22, 0
      %p85 = por %p83, %p84
      %p86 = scmp.ne.s32.totalorder %s74, %s75
      %p87 = scmp.eq.s32.totalorder %s23, 1
      %p88 = por %p86, %p87
      %p90 = scmp.ne.s32.totalorder %s75, %s89
      %p91 = scmp.eq.s32.totalorder %s23, 0
      %p92 = por %p90, %p91
      %s94 = sadd.s32 %s93, 1
      %p97 = scmp.eq.s32.totalorder %s17, 1
      %p98 = scmp.ne.s32.totalorder %s93, %s95
      %p99 = scmp.eq.s32.totalorder %s17, 0
      %p100 = por %p98, %p99
      %p101 = scmp.ne.s32.totalorder %s93, %s95
      %p102 = scmp.eq.s32.totalorder %s22, 1
      %p103 = por %p101, %p102
      %p104 = scmp.ne.s32.totalorder %s95, %s96
      %p105 = scmp.eq.s32.totalorder %s22, 0
      %p106 = por %p104, %p105
      %p107 = scmp.ne.s32.totalorder %s95, %s96
      %p108 = scmp.eq.s32.totalorder %s23, 1
      %p109 = por %p107, %p108
      %p111 = scmp.ne.s32.totalorder %s96, %s110
      %p112 = scmp.eq.s32.totalorder %s23, 0
      %p113 = por %p111, %p112
      %s114 = ssub.s32 %s17, %s24
      %p115 = scmp.eq.s32.totalorder %s114, 0
      %s117 = sadd.s32 %s116, 1
      %s118 = scalar_select %p115, %s116, %s117
      %p121 = pneg %p115
      %p122 = scmp.eq.s32.totalorder %s17, 1
      %p123 = por %p121, %p122
      %p124 = scmp.ne.s32.totalorder %s116, %s119
      %p125 = scmp.eq.s32.totalorder %s17, 0
      %p126 = por %p124, %p125
      %p127 = scmp.ne.s32.totalorder %s116, %s119
      %p128 = scmp.eq.s32.totalorder %s22, 1
      %p129 = por %p127, %p128
      %p130 = scmp.ne.s32.totalorder %s119, %s120
      %p131 = scmp.eq.s32.totalorder %s22, 0
      %p132 = por %p130, %p131
      %p133 = scmp.ne.s32.totalorder %s119, %s120
      %p134 = scmp.eq.s32.totalorder %s23, 1
      %p135 = por %p133, %p134
      %p137 = scmp.ne.s32.totalorder %s120, %s136
      %p138 = scmp.eq.s32.totalorder %s23, 0
      %p139 = por %p137, %p138
      %p140 = scmp.le.s32.totalorder 1, %s17
      %p141 = scmp.lt.s32.totalorder %s17, 3
      %p142 = pnand %p140, %p141
      %p143 = pneg %p142
      // Predicated region
      $region9: #{tpu_custom_call.1} parent=5 // pred_check
        _
      $region10: #{tpu_custom_call.1} parent=5 // pred_check_branch
        %145 = sbr.rel (%p142) target = $region12
      $region11: #{tpu_custom_call.1} parent=5 // pred_region
        %s146 = ssub.s32 %s17, 1
        // Predicated region
        $region13: #{tpu_custom_call.1} parent=11 // pred_check
          %p147 = pneg %p64
        $region14: #{tpu_custom_call.1} parent=11 // pred_check_branch
          %149 = sbr.rel (%p147) target = $region16
        $region15: #{tpu_custom_call.1} parent=11 // pred_region
          %s151 = ssub.s32 512, 512
          %152 = vsyncadd [#allocation6], %s151
          %s153 = sshll.u32 [#allocation5], 4
          %s154 = int_to_ptr.vmem [resolvable:$true] %s153
          %159 = dma.hbm_to_vmem [thread:$0]  %s1, 512, %s154, [#allocation6], 128, 128, 8
        $region16: #{tpu_custom_call.1} parent=11 // pred_fallthru
          _
        // Predicated region
        $region17: #{tpu_custom_call.1} parent=11 // pred_check
          %p160 = pneg %p85
        $region18: #{tpu_custom_call.1} parent=11 // pred_check_branch
          %162 = sbr.rel (%p160) target = $region20
        $region19: #{tpu_custom_call.1} parent=11 // pred_region
          %s164 = ssub.s32 512, 512
          %165 = vsyncadd [#allocation6], %s164
          %s166 = sshll.u32 [#allocation7], 4
          %s167 = int_to_ptr.vmem [resolvable:$true] %s166
          %172 = dma.hbm_to_vmem [thread:$0]  %s2, 512, %s167, [#allocation6], 128, 128, 8
        $region20: #{tpu_custom_call.1} parent=11 // pred_fallthru
          _
        // Predicated region
        $region21: #{tpu_custom_call.1} parent=11 // pred_check
          %p173 = pneg %p106
        $region22: #{tpu_custom_call.1} parent=11 // pred_check_branch
          %175 = sbr.rel (%p173) target = $region24
        $region23: #{tpu_custom_call.1} parent=11 // pred_region
          _
        $region24: #{tpu_custom_call.1} parent=11 // pred_fallthru
          _
      $region12: #{tpu_custom_call.1} parent=5 // pred_fallthru
        _
      %p176 = scmp.lt.s32.totalorder %s17, 2
      // Predicated region
      $region25: #{tpu_custom_call.1} parent=5 // pred_check
        %p177 = pneg %p176
      $region26: #{tpu_custom_call.1} parent=5 // pred_check_branch
        %179 = sbr.rel (%p177) target = $region28
      $region27: #{tpu_custom_call.1} parent=5 // pred_region
        // Predicated region
        $region29: #{tpu_custom_call.1} parent=27 // pred_check
          %p180 = pneg %p37
        $region30: #{tpu_custom_call.1} parent=27 // pred_check_branch
          %182 = sbr.rel (%p180) target = $region32
        $region31: #{tpu_custom_call.1} parent=27 // pred_region
          %s183 = sand.u32 %s27, 1
          %s184 = scalar_lea.sflag [#allocation3], %s183
          %s185 = sand.u32 %s27, 1
          %s186 = smul.addr %s185, 8
          %s187 = scalar_lea.vmem [#allocation2], %s186
          %s189 = ssub.s32 128, 128
          %190 = vsyncadd %s184, %s189
          %s191 = smul.addr %s17, 128
          %s192 = scalar_lea.hbm %s0, %s191
          %s194 = sshll.u32 %s187, 4
          %s195 = int_to_ptr.vmem [resolvable:$true] %s194
          %197 = dma.hbm_to_vmem [thread:$0]  %s192, 128, %s195, %s184
        $region32: #{tpu_custom_call.1} parent=27 // pred_fallthru
          _
      $region28: #{tpu_custom_call.1} parent=5 // pred_fallthru
        _
      %p198 = scmp.le.s32.totalorder 1, %s17
      %p199 = scmp.lt.s32.totalorder %s17, 3
      %p200 = pnand %p198, %p199
      %p201 = pneg %p200
      // Predicated region
      $region33: #{tpu_custom_call.1} parent=5 // pred_check
        _
      $region34: #{tpu_custom_call.1} parent=5 // pred_check_branch
        %203 = sbr.rel (%p200) target = $region36
      $region35: #{tpu_custom_call.1} parent=5 // pred_region
        %s204 = ssub.s32 %s17, 1
        %s205 = sand.u32 %s30, 1
        %s206 = scalar_lea.sflag [#allocation3], %s205
        %s207 = sand.u32 %s30, 1
        %s208 = smul.addr %s207, 8
        %s209 = scalar_lea.vmem [#allocation2], %s208
        // Predicated region
        $region37: #{tpu_custom_call.1} parent=35 // pred_check
          %p210 = pneg %p43
        $region38: #{tpu_custom_call.1} parent=35 // pred_check_branch
          %212 = sbr.rel (%p210) target = $region40
        $region39: #{tpu_custom_call.1} parent=35 // pred_region
          %213 = dma.done %s206, 128
        $region40: #{tpu_custom_call.1} parent=35 // pred_fallthru
          _
        // Predicated region
        $region41: #{tpu_custom_call.1} parent=35 // pred_check
          %p214 = pneg %p64
        $region42: #{tpu_custom_call.1} parent=35 // pred_check_branch
          %216 = sbr.rel (%p214) target = $region44
        $region43: #{tpu_custom_call.1} parent=35 // pred_region
          %217 = dma.done [#allocation6], 512
        $region44: #{tpu_custom_call.1} parent=35 // pred_fallthru
          _
        // Predicated region
        $region45: #{tpu_custom_call.1} parent=35 // pred_check
          %p218 = pneg %p85
        $region46: #{tpu_custom_call.1} parent=35 // pred_check_branch
          %220 = sbr.rel (%p218) target = $region48
        $region47: #{tpu_custom_call.1} parent=35 // pred_region
          %221 = dma.done [#allocation6], 512
        $region48: #{tpu_custom_call.1} parent=35 // pred_fallthru
          _
        %s222 = sand.u32 %s30, 1
        %s223 = scalar_lea.sflag [#allocation3], %s222
        %s224 = sand.u32 %s30, 1
        %s225 = smul.addr %s224, 8
        %s226 = scalar_lea.vmem [#allocation2], %s225
        %p227 = pneg %p43
        %p228 = pneg %p40
        %p229 = pneg %p64
        %p230 = pneg %p61
        %p231 = pneg %p85
        %p232 = pneg %p82
        %p233 = pneg %p106
        %p234 = pneg %p103
        %p235 = pneg %p132
        %p236 = pneg %p129
        %s237 = sand.u32 %s119, 1
        %s238 = scalar_lea.sflag [#allocation4], %s237
        %s239 = sand.u32 %s119, 1
        %s240 = smul.addr %s239, 8
        %s241 = scalar_lea.vmem [#allocation8], %s240
        %v242 = vld [vmem:[%s209] sm:$0xff]
        %v243 = vld [vmem:[#allocation5] sm:$0xff]
        %v244 = vld [vmem:[#allocation5 + $0x8] sm:$0xff]
        %v245 = vld [vmem:[#allocation5 + $0x10] sm:$0xff]
        %v246 = vld [vmem:[#allocation5 + $0x18] sm:$0xff]
        %vm247 = vcmask 261120
        %v249 = vsel %vm247, %v242, 0
        %251 = vmatprep.subr.mxu0 0.0
        %252 = vmatpush1.msra.mxu0 0.0
        %253 = vmatprep.subr.mxu0 0.0
        %254 = vmatpush1.msra.mxu0 0.0
        %255 = vmatprep.subr.mxu0 0.0
        %256 = vmatpush1.msra.mxu0 0.0
        %257 = vmatprep.subr.mxu0 0.0
        %258 = vmatpush1.msra.mxu0 0.0
        %259 = vmatprep.subr.mxu0 0.0
        %260 = vmatpush1.msra.mxu0 0.0
        %261 = vmatprep.subr.mxu0 0.0
        %262 = vmatpush1.msra.mxu0 0.0
        %263 = vmatprep.subr.mxu0 0.0
        %264 = vmatpush1.msra.mxu0 0.0
        %265 = vmatprep.subr.mxu0 0.0
        %266 = vmatpush1.msra.mxu0 0.0
        %267 = vmatprep.subr.mxu0 0.0
        %268 = vmatpush1.msra.mxu0 0.0
        %269 = vmatprep.subr.mxu0 0.0
        %270 = vmatpush1.msra.mxu0 0.0
        %271 = vmatprep.subr.mxu0 0.0
        %272 = vmatpush1.msra.mxu0 0.0
        %273 = vmatprep.subr.mxu0 0.0
        %274 = vmatpush1.msra.mxu0 0.0
        %275 = vmatprep.subr.mxu0 0.0
        %276 = vmatpush1.msra.mxu0 %v246
        %277 = vmatprep.subr.mxu0 0.0
        %278 = vmatpush1.msra.mxu0 %v245
        %279 = vmatprep.subr.mxu0 0.0
        %280 = vmatpush1.msra.mxu0 %v244
        %281 = vmatprep.subr.mxu0 0.0
        %282 = vmatpush1.msra.mxu0 %v243
        %283 = vmatprep.subr.mxu0 0.0
        %284 = vmatpush2.msra.mxu0 0.0
        %285 = vmatprep.subr.mxu0 0.0
        %286 = vmatpush2.msra.mxu0 0.0
        %287 = vmatprep.subr.mxu0 0.0
        %288 = vmatpush2.msra.mxu0 0.0
        %289 = vmatprep.subr.mxu0 0.0
        %290 = vmatpush2.msra.mxu0 0.0
        %291 = vmatprep.subr.mxu0 0.0
        %292 = vmatpush2.msra.mxu0 0.0
        %293 = vmatprep.subr.mxu0 0.0
        %294 = vmatpush2.msra.mxu0 0.0
        %295 = vmatprep.subr.mxu0 0.0
        %296 = vmatpush2.msra.mxu0 0.0
        %297 = vmatprep.subr.mxu0 0.0
        %298 = vmatpush2.msra.mxu0 0.0
        %299 = vmatprep.subr.mxu0 0.0
        %300 = vmatpush2.msra.mxu0 0.0
        %301 = vmatprep.subr.mxu0 0.0
        %302 = vmatpush2.msra.mxu0 0.0
        %303 = vmatprep.subr.mxu0 0.0
        %304 = vmatpush2.msra.mxu0 0.0
        %305 = vmatprep.subr.mxu0 0.0
        %306 = vmatpush2.msra.mxu0 0.0
        %307 = vmatprep.subr.mxu0 0.0
        %308 = vmatpush2.msra.mxu0 0.0
        %309 = vmatprep.subr.mxu0 0.0
        %310 = vmatpush2.msra.mxu0 0.0
        %311 = vmatprep.subr.mxu0 0.0
        %312 = vmatpush2.msra.mxu0 0.0
        %313 = vmatprep.subr.mxu0 0.0
        %314 = vmatpush2.msra.mxu0 0.0
        %315 = vmatprep.mubr.f32.mxu0 0.0
        %316 = vmatmul.mubr.f32.gmra.mxu0 %v249
        %v317 = vpop.f32.mrf.mxu0
        %v318 = vadd.f32 0.0, %v317
        %v319 = vpop.f32.mrf.mxu0
        %320 = vdwg.mxu0
        %v321 = vlaneseq
        %v322 = vshrl.u32 %v321, 7
        %v323 = vlaneseq
        %v324 = vand.u32 %v323, 127
        %vm325 = vcmp.le.s32.totalorder %v324, %v322
        %327 = vrot.lane.b32.xlu0 %v318, 96
        %v328 = vpop.permute.xlu0 %327
        %vm329 = vcmask 64512
        %v330 = vsel %vm329, %v318, 0
        %v332 = vsel %vm329, %v328, 0
        %334 = vmatprep.subr.mxu0 0.0
        %335 = vmatpush1.xpose.msra.mxu0 0.0
        %336 = vmatprep.subr.mxu0 0.0
        %337 = vmatpush1.xpose.msra.mxu0 0.0
        %338 = vmatprep.subr.mxu0 0.0
        %339 = vmatpush1.xpose.msra.mxu0 0.0
        %340 = vmatprep.subr.mxu0 0.0
        %341 = vmatpush1.xpose.msra.mxu0 0.0
        %342 = vmatprep.subr.mxu0 0.0
        %343 = vmatpush1.xpose.msra.mxu0 0.0
        %344 = vmatprep.subr.mxu0 0.0
        %345 = vmatpush1.xpose.msra.mxu0 0.0
        %346 = vmatprep.subr.mxu0 0.0
        %347 = vmatpush1.xpose.msra.mxu0 0.0
        %348 = vmatprep.subr.mxu0 0.0
        %349 = vmatpush1.xpose.msra.mxu0 0.0
        %350 = vmatprep.subr.mxu0 0.0
        %351 = vmatpush1.xpose.msra.mxu0 0.0
        %352 = vmatprep.subr.mxu0 0.0
        %353 = vmatpush1.xpose.msra.mxu0 0.0
        %354 = vmatprep.subr.mxu0 0.0
        %355 = vmatpush1.xpose.msra.mxu0 0.0
        %356 = vmatprep.subr.mxu0 0.0
        %357 = vmatpush1.xpose.msra.mxu0 0.0
        %358 = vmatprep.subr.mxu0 0.0
        %359 = vmatpush1.xpose.msra.mxu0 0.0
        %360 = vmatprep.subr.mxu0 0.0
        %361 = vmatpush1.xpose.msra.mxu0 0.0
        %362 = vmatprep.subr.mxu0 0.0
        %363 = vmatpush1.xpose.msra.mxu0 0.0
        %364 = vmatprep.subr.mxu0 0.0
        %365 = vmatpush1.xpose.msra.mxu0 %v332
        %366 = vmatprep.subr.mxu0 0.0
        %367 = vmatpush2.xpose.msra.mxu0 0.0
        %368 = vmatprep.subr.mxu0 0.0
        %369 = vmatpush2.xpose.msra.mxu0 0.0
        %370 = vmatprep.subr.mxu0 0.0
        %371 = vmatpush2.xpose.msra.mxu0 0.0
        %372 = vmatprep.subr.mxu0 0.0
        %373 = vmatpush2.xpose.msra.mxu0 0.0
        %374 = vmatprep.subr.mxu0 0.0
        %375 = vmatpush2.xpose.msra.mxu0 0.0
        %376 = vmatprep.subr.mxu0 0.0
        %377 = vmatpush2.xpose.msra.mxu0 0.0
        %378 = vmatprep.subr.mxu0 0.0
        %379 = vmatpush2.xpose.msra.mxu0 0.0
        %380 = vmatprep.subr.mxu0 0.0
        %381 = vmatpush2.xpose.msra.mxu0 0.0
        %382 = vmatprep.subr.mxu0 0.0
        %383 = vmatpush2.xpose.msra.mxu0 0.0
        %384 = vmatprep.subr.mxu0 0.0
        %385 = vmatpush2.xpose.msra.mxu0 0.0
        %386 = vmatprep.subr.mxu0 0.0
        %387 = vmatpush2.xpose.msra.mxu0 0.0
        %388 = vmatprep.subr.mxu0 0.0
        %389 = vmatpush2.xpose.msra.mxu0 0.0
        %390 = vmatprep.subr.mxu0 0.0
        %391 = vmatpush2.xpose.msra.mxu0 0.0
        %392 = vmatprep.subr.mxu0 0.0
        %393 = vmatpush2.xpose.msra.mxu0 0.0
        %394 = vmatprep.subr.mxu0 0.0
        %395 = vmatpush2.xpose.msra.mxu0 0.0
        %396 = vmatprep.subr.mxu0 0.0
        %397 = vmatpush2.xpose.msra.mxu0 0.0
        %398 = vmatprep.mubr.f32.mxu0 0.0
        %399 = vmatmul.mubr.f32.gmra.mxu0 %v330
        %v400 = vpop.f32.mrf.mxu0
        %v401 = vadd.f32 0.0, %v400
        %v402 = vpop.f32.mrf.mxu0
        %403 = vdwg.mxu0
        %v404 = vsel %vm325, %v401, -inf
        %v405 = vsel %vm329, %v404, -inf
        %406 = vmax.xlane.f32.xlu0 %v405
        %v407 = vpop.xlane.xlu0 %406
        %v408 = vsub.f32 %v404, %v407
        %v409 = vmul.f32 %v408, 1.442695
        %v410 = vpow.pop %v409
        %v411 = vsel %vm329, %v410, 0.0
        %412 = vadd.xlane.f32.xlu0 %v411
        %v413 = vpop.xlane.xlu0 %412
        %v414 = vrcp.pop %v413
        %v415 = vmul.f32 %v410, %v414
        %416 = vrot.lane.b32.xlu0 %v318, 64
        %v417 = vpop.permute.xlu0 %416
        %v420 = vsel %vm329, %v415, 0
        %422 = vmatprep.subr.mxu0 0.0
        %423 = vmatpush1.msra.mxu0 0.0
        %424 = vmatprep.subr.mxu0 0.0
        %425 = vmatpush1.msra.mxu0 0.0
        %426 = vmatprep.subr.mxu0 0.0
        %427 = vmatpush1.msra.mxu0 0.0
        %428 = vmatprep.subr.mxu0 0.0
        %429 = vmatpush1.msra.mxu0 0.0
        %430 = vmatprep.subr.mxu0 0.0
        %431 = vmatpush1.msra.mxu0 0.0
        %432 = vmatprep.subr.mxu0 0.0
        %433 = vmatpush1.msra.mxu0 0.0
        %434 = vmatprep.subr.mxu0 0.0
        %435 = vmatpush1.msra.mxu0 0.0
        %436 = vmatprep.subr.mxu0 0.0
        %437 = vmatpush1.msra.mxu0 0.0
        %438 = vmatprep.subr.mxu0 0.0
        %439 = vmatpush1.msra.mxu0 0.0
        %440 = vmatprep.subr.mxu0 0.0
        %441 = vmatpush1.msra.mxu0 0.0
        %442 = vmatprep.subr.mxu0 0.0
        %443 = vmatpush1.msra.mxu0 0.0
        %444 = vmatprep.subr.mxu0 0.0
        %445 = vmatpush1.msra.mxu0 0.0
        %446 = vmatprep.subr.mxu0 0.0
        %447 = vmatpush1.msra.mxu0 0.0
        %448 = vmatprep.subr.mxu0 0.0
        %449 = vmatpush1.msra.mxu0 0.0
        %450 = vmatprep.subr.mxu0 0.0
        %451 = vmatpush1.msra.mxu0 0.0
        %452 = vmatprep.subr.mxu0 0.0
        %453 = vmatpush1.msra.mxu0 %v417
        %454 = vmatprep.subr.mxu0 0.0
        %455 = vmatpush2.msra.mxu0 0.0
        %456 = vmatprep.subr.mxu0 0.0
        %457 = vmatpush2.msra.mxu0 0.0
        %458 = vmatprep.subr.mxu0 0.0
        %459 = vmatpush2.msra.mxu0 0.0
        %460 = vmatprep.subr.mxu0 0.0
        %461 = vmatpush2.msra.mxu0 0.0
        %462 = vmatprep.subr.mxu0 0.0
        %463 = vmatpush2.msra.mxu0 0.0
        %464 = vmatprep.subr.mxu0 0.0
        %465 = vmatpush2.msra.mxu0 0.0
        %466 = vmatprep.subr.mxu0 0.0
        %467 = vmatpush2.msra.mxu0 0.0
        %468 = vmatprep.subr.mxu0 0.0
        %469 = vmatpush2.msra.mxu0 0.0
        %470 = vmatprep.subr.mxu0 0.0
        %471 = vmatpush2.msra.mxu0 0.0
        %472 = vmatprep.subr.mxu0 0.0
        %473 = vmatpush2.msra.mxu0 0.0
        %474 = vmatprep.subr.mxu0 0.0
        %475 = vmatpush2.msra.mxu0 0.0
        %476 = vmatprep.subr.mxu0 0.0
        %477 = vmatpush2.msra.mxu0 0.0
        %478 = vmatprep.subr.mxu0 0.0
        %479 = vmatpush2.msra.mxu0 0.0
        %480 = vmatprep.subr.mxu0 0.0
        %481 = vmatpush2.msra.mxu0 0.0
        %482 = vmatprep.subr.mxu0 0.0
        %483 = vmatpush2.msra.mxu0 0.0
        %484 = vmatprep.subr.mxu0 0.0
        %485 = vmatpush2.msra.mxu0 0.0
        %486 = vmatprep.mubr.f32.mxu0 0.0
        %487 = vmatmul.mubr.f32.gmra.mxu0 %v420
        %v488 = vpop.f32.mrf.mxu0
        %v489 = vadd.f32 0.0, %v488
        %v490 = vpop.f32.mrf.mxu0
        %491 = vdwg.mxu0
        %492 = vrot.lane.b32.xlu0 %v318, 120
        %v493 = vpop.permute.xlu0 %492
        %494 = vrot.lane.b32.xlu0 %v318, 88
        %v495 = vpop.permute.xlu0 %494
        %v496 = vsel %vm329, %v493, 0
        %v498 = vsel %vm329, %v495, 0
        %500 = vmatprep.subr.mxu0 0.0
        %501 = vmatpush1.xpose.msra.mxu0 0.0
        %502 = vmatprep.subr.mxu0 0.0
        %503 = vmatpush1.xpose.msra.mxu0 0.0
        %504 = vmatprep.subr.mxu0 0.0
        %505 = vmatpush1.xpose.msra.mxu0 0.0
        %506 = vmatprep.subr.mxu0 0.0
        %507 = vmatpush1.xpose.msra.mxu0 0.0
        %508 = vmatprep.subr.mxu0 0.0
        %509 = vmatpush1.xpose.msra.mxu0 0.0
        %510 = vmatprep.subr.mxu0 0.0
        %511 = vmatpush1.xpose.msra.mxu0 0.0
        %512 = vmatprep.subr.mxu0 0.0
        %513 = vmatpush1.xpose.msra.mxu0 0.0
        %514 = vmatprep.subr.mxu0 0.0
        %515 = vmatpush1.xpose.msra.mxu0 0.0
        %516 = vmatprep.subr.mxu0 0.0
        %517 = vmatpush1.xpose.msra.mxu0 0.0
        %518 = vmatprep.subr.mxu0 0.0
        %519 = vmatpush1.xpose.msra.mxu0 0.0
        %520 = vmatprep.subr.mxu0 0.0
        %521 = vmatpush1.xpose.msra.mxu0 0.0
        %522 = vmatprep.subr.mxu0 0.0
        %523 = vmatpush1.xpose.msra.mxu0 0.0
        %524 = vmatprep.subr.mxu0 0.0
        %525 = vmatpush1.xpose.msra.mxu0 0.0
        %526 = vmatprep.subr.mxu0 0.0
        %527 = vmatpush1.xpose.msra.mxu0 0.0
        %528 = vmatprep.subr.mxu0 0.0
        %529 = vmatpush1.xpose.msra.mxu0 0.0
        %530 = vmatprep.subr.mxu0 0.0
        %531 = vmatpush1.xpose.msra.mxu0 %v498
        %532 = vmatprep.subr.mxu0 0.0
        %533 = vmatpush2.xpose.msra.mxu0 0.0
        %534 = vmatprep.subr.mxu0 0.0
        %535 = vmatpush2.xpose.msra.mxu0 0.0
        %536 = vmatprep.subr.mxu0 0.0
        %537 = vmatpush2.xpose.msra.mxu0 0.0
        %538 = vmatprep.subr.mxu0 0.0
        %539 = vmatpush2.xpose.msra.mxu0 0.0
        %540 = vmatprep.subr.mxu0 0.0
        %541 = vmatpush2.xpose.msra.mxu0 0.0
        %542 = vmatprep.subr.mxu0 0.0
        %543 = vmatpush2.xpose.msra.mxu0 0.0
        %544 = vmatprep.subr.mxu0 0.0
        %545 = vmatpush2.xpose.msra.mxu0 0.0
        %546 = vmatprep.subr.mxu0 0.0
        %547 = vmatpush2.xpose.msra.mxu0 0.0
        %548 = vmatprep.subr.mxu0 0.0
        %549 = vmatpush2.xpose.msra.mxu0 0.0
        %550 = vmatprep.subr.mxu0 0.0
        %551 = vmatpush2.xpose.msra.mxu0 0.0
        %552 = vmatprep.subr.mxu0 0.0
        %553 = vmatpush2.xpose.msra.mxu0 0.0
        %554 = vmatprep.subr.mxu0 0.0
        %555 = vmatpush2.xpose.msra.mxu0 0.0
        %556 = vmatprep.subr.mxu0 0.0
        %557 = vmatpush2.xpose.msra.mxu0 0.0
        %558 = vmatprep.subr.mxu0 0.0
        %559 = vmatpush2.xpose.msra.mxu0 0.0
        %560 = vmatprep.subr.mxu0 0.0
        %561 = vmatpush2.xpose.msra.mxu0 0.0
        %562 = vmatprep.subr.mxu0 0.0
        %563 = vmatpush2.xpose.msra.mxu0 0.0
        %564 = vmatprep.mubr.f32.mxu0 0.0
        %565 = vmatmul.mubr.f32.gmra.mxu0 %v496
        %v566 = vpop.f32.mrf.mxu0
        %v567 = vadd.f32 0.0, %v566
        %v568 = vpop.f32.mrf.mxu0
        %569 = vdwg.mxu0
        %v570 = vsel %vm325, %v567, -inf
        %v571 = vsel %vm329, %v570, -inf
        %572 = vmax.xlane.f32.xlu0 %v571
        %v573 = vpop.xlane.xlu0 %572
        %v574 = vsub.f32 %v570, %v573
        %v575 = vmul.f32 %v574, 1.442695
        %v576 = vpow.pop %v575
        %v577 = vsel %vm329, %v576, 0.0
        %578 = vadd.xlane.f32.xlu0 %v577
        %v579 = vpop.xlane.xlu0 %578
        %v580 = vrcp.pop %v579
        %v581 = vmul.f32 %v576, %v580
        %582 = vrot.lane.b32.xlu0 %v318, 56
        %v583 = vpop.permute.xlu0 %582
        %v586 = vsel %vm329, %v581, 0
        %588 = vmatprep.subr.mxu0 0.0
        %589 = vmatpush1.msra.mxu0 0.0
        %590 = vmatprep.subr.mxu0 0.0
        %591 = vmatpush1.msra.mxu0 0.0
        %592 = vmatprep.subr.mxu0 0.0
        %593 = vmatpush1.msra.mxu0 0.0
        %594 = vmatprep.subr.mxu0 0.0
        %595 = vmatpush1.msra.mxu0 0.0
        %596 = vmatprep.subr.mxu0 0.0
        %597 = vmatpush1.msra.mxu0 0.0
        %598 = vmatprep.subr.mxu0 0.0
        %599 = vmatpush1.msra.mxu0 0.0
        %600 = vmatprep.subr.mxu0 0.0
        %601 = vmatpush1.msra.mxu0 0.0
        %602 = vmatprep.subr.mxu0 0.0
        %603 = vmatpush1.msra.mxu0 0.0
        %604 = vmatprep.subr.mxu0 0.0
        %605 = vmatpush1.msra.mxu0 0.0
        %606 = vmatprep.subr.mxu0 0.0
        %607 = vmatpush1.msra.mxu0 0.0
        %608 = vmatprep.subr.mxu0 0.0
        %609 = vmatpush1.msra.mxu0 0.0
        %610 = vmatprep.subr.mxu0 0.0
        %611 = vmatpush1.msra.mxu0 0.0
        %612 = vmatprep.subr.mxu0 0.0
        %613 = vmatpush1.msra.mxu0 0.0
        %614 = vmatprep.subr.mxu0 0.0
        %615 = vmatpush1.msra.mxu0 0.0
        %616 = vmatprep.subr.mxu0 0.0
        %617 = vmatpush1.msra.mxu0 0.0
        %618 = vmatprep.subr.mxu0 0.0
        %619 = vmatpush1.msra.mxu0 %v583
        %620 = vmatprep.subr.mxu0 0.0
        %621 = vmatpush2.msra.mxu0 0.0
        %622 = vmatprep.subr.mxu0 0.0
        %623 = vmatpush2.msra.mxu0 0.0
        %624 = vmatprep.subr.mxu0 0.0
        %625 = vmatpush2.msra.mxu0 0.0
        %626 = vmatprep.subr.mxu0 0.0
        %627 = vmatpush2.msra.mxu0 0.0
        %628 = vmatprep.subr.mxu0 0.0
        %629 = vmatpush2.msra.mxu0 0.0
        %630 = vmatprep.subr.mxu0 0.0
        %631 = vmatpush2.msra.mxu0 0.0
        %632 = vmatprep.subr.mxu0 0.0
        %633 = vmatpush2.msra.mxu0 0.0
        %634 = vmatprep.subr.mxu0 0.0
        %635 = vmatpush2.msra.mxu0 0.0
        %636 = vmatprep.subr.mxu0 0.0
        %637 = vmatpush2.msra.mxu0 0.0
        %638 = vmatprep.subr.mxu0 0.0
        %639 = vmatpush2.msra.mxu0 0.0
        %640 = vmatprep.subr.mxu0 0.0
        %641 = vmatpush2.msra.mxu0 0.0
        %642 = vmatprep.subr.mxu0 0.0
        %643 = vmatpush2.msra.mxu0 0.0
        %644 = vmatprep.subr.mxu0 0.0
        %645 = vmatpush2.msra.mxu0 0.0
        %646 = vmatprep.subr.mxu0 0.0
        %647 = vmatpush2.msra.mxu0 0.0
        %648 = vmatprep.subr.mxu0 0.0
        %649 = vmatpush2.msra.mxu0 0.0
        %650 = vmatprep.subr.mxu0 0.0
        %651 = vmatpush2.msra.mxu0 0.0
        %652 = vmatprep.mubr.f32.mxu0 0.0
        %653 = vmatmul.mubr.f32.gmra.mxu0 %v586
        %v654 = vpop.f32.mrf.mxu0
        %v655 = vadd.f32 0.0, %v654
        %v656 = vpop.f32.mrf.mxu0
        %657 = vdwg.mxu0
        %658 = vrot.lane.b32.xlu0 %v318, 112
        %v659 = vpop.permute.xlu0 %658
        %660 = vrot.lane.b32.xlu0 %v318, 80
        %v661 = vpop.permute.xlu0 %660
        %v662 = vsel %vm329, %v659, 0
        %v664 = vsel %vm329, %v661, 0
        %666 = vmatprep.subr.mxu0 0.0
        %667 = vmatpush1.xpose.msra.mxu0 0.0
        %668 = vmatprep.subr.mxu0 0.0
        %669 = vmatpush1.xpose.msra.mxu0 0.0
        %670 = vmatprep.subr.mxu0 0.0
        %671 = vmatpush1.xpose.msra.mxu0 0.0
        %672 = vmatprep.subr.mxu0 0.0
        %673 = vmatpush1.xpose.msra.mxu0 0.0
        %674 = vmatprep.subr.mxu0 0.0
        %675 = vmatpush1.xpose.msra.mxu0 0.0
        %676 = vmatprep.subr.mxu0 0.0
        %677 = vmatpush1.xpose.msra.mxu0 0.0
        %678 = vmatprep.subr.mxu0 0.0
        %679 = vmatpush1.xpose.msra.mxu0 0.0
        %680 = vmatprep.subr.mxu0 0.0
        %681 = vmatpush1.xpose.msra.mxu0 0.0
        %682 = vmatprep.subr.mxu0 0.0
        %683 = vmatpush1.xpose.msra.mxu0 0.0
        %684 = vmatprep.subr.mxu0 0.0
        %685 = vmatpush1.xpose.msra.mxu0 0.0
        %686 = vmatprep.subr.mxu0 0.0
        %687 = vmatpush1.xpose.msra.mxu0 0.0
        %688 = vmatprep.subr.mxu0 0.0
        %689 = vmatpush1.xpose.msra.mxu0 0.0
        %690 = vmatprep.subr.mxu0 0.0
        %691 = vmatpush1.xpose.msra.mxu0 0.0
        %692 = vmatprep.subr.mxu0 0.0
        %693 = vmatpush1.xpose.msra.mxu0 0.0
        %694 = vmatprep.subr.mxu0 0.0
        %695 = vmatpush1.xpose.msra.mxu0 0.0
        %696 = vmatprep.subr.mxu0 0.0
        %697 = vmatpush1.xpose.msra.mxu0 %v664
        %698 = vmatprep.subr.mxu0 0.0
        %699 = vmatpush2.xpose.msra.mxu0 0.0
        %700 = vmatprep.subr.mxu0 0.0
        %701 = vmatpush2.xpose.msra.mxu0 0.0
        %702 = vmatprep.subr.mxu0 0.0
        %703 = vmatpush2.xpose.msra.mxu0 0.0
        %704 = vmatprep.subr.mxu0 0.0
        %705 = vmatpush2.xpose.msra.mxu0 0.0
        %706 = vmatprep.subr.mxu0 0.0
        %707 = vmatpush2.xpose.msra.mxu0 0.0
        %708 = vmatprep.subr.mxu0 0.0
        %709 = vmatpush2.xpose.msra.mxu0 0.0
        %710 = vmatprep.subr.mxu0 0.0
        %711 = vmatpush2.xpose.msra.mxu0 0.0
        %712 = vmatprep.subr.mxu0 0.0
        %713 = vmatpush2.xpose.msra.mxu0 0.0
        %714 = vmatprep.subr.mxu0 0.0
        %715 = vmatpush2.xpose.msra.mxu0 0.0
        %716 = vmatprep.subr.mxu0 0.0
        %717 = vmatpush2.xpose.msra.mxu0 0.0
        %718 = vmatprep.subr.mxu0 0.0
        %719 = vmatpush2.xpose.msra.mxu0 0.0
        %720 = vmatprep.subr.mxu0 0.0
        %721 = vmatpush2.xpose.msra.mxu0 0.0
        %722 = vmatprep.subr.mxu0 0.0
        %723 = vmatpush2.xpose.msra.mxu0 0.0
        %724 = vmatprep.subr.mxu0 0.0
        %725 = vmatpush2.xpose.msra.mxu0 0.0
        %726 = vmatprep.subr.mxu0 0.0
        %727 = vmatpush2.xpose.msra.mxu0 0.0
        %728 = vmatprep.subr.mxu0 0.0
        %729 = vmatpush2.xpose.msra.mxu0 0.0
        %730 = vmatprep.mubr.f32.mxu0 0.0
        %731 = vmatmul.mubr.f32.gmra.mxu0 %v662
        %v732 = vpop.f32.mrf.mxu0
        %v733 = vadd.f32 0.0, %v732
        %v734 = vpop.f32.mrf.mxu0
        %735 = vdwg.mxu0
        %v736 = vsel %vm325, %v733, -inf
        %v737 = vsel %vm329, %v736, -inf
        %738 = vmax.xlane.f32.xlu0 %v737
        %v739 = vpop.xlane.xlu0 %738
        %v740 = vsub.f32 %v736, %v739
        %v741 = vmul.f32 %v740, 1.442695
        %v742 = vpow.pop %v741
        %v743 = vsel %vm329, %v742, 0.0
        %744 = vadd.xlane.f32.xlu0 %v743
        %v745 = vpop.xlane.xlu0 %744
        %v746 = vrcp.pop %v745
        %v747 = vmul.f32 %v742, %v746
        %748 = vrot.lane.b32.xlu0 %v318, 48
        %v749 = vpop.permute.xlu0 %748
        %v752 = vsel %vm329, %v747, 0
        %754 = vmatprep.subr.mxu0 0.0
        %755 = vmatpush1.msra.mxu0 0.0
        %756 = vmatprep.subr.mxu0 0.0
        %757 = vmatpush1.msra.mxu0 0.0
        %758 = vmatprep.subr.mxu0 0.0
        %759 = vmatpush1.msra.mxu0 0.0
        %760 = vmatprep.subr.mxu0 0.0
        %761 = vmatpush1.msra.mxu0 0.0
        %762 = vmatprep.subr.mxu0 0.0
        %763 = vmatpush1.msra.mxu0 0.0
        %764 = vmatprep.subr.mxu0 0.0
        %765 = vmatpush1.msra.mxu0 0.0
        %766 = vmatprep.subr.mxu0 0.0
        %767 = vmatpush1.msra.mxu0 0.0
        %768 = vmatprep.subr.mxu0 0.0
        %769 = vmatpush1.msra.mxu0 0.0
        %770 = vmatprep.subr.mxu0 0.0
        %771 = vmatpush1.msra.mxu0 0.0
        %772 = vmatprep.subr.mxu0 0.0
        %773 = vmatpush1.msra.mxu0 0.0
        %774 = vmatprep.subr.mxu0 0.0
        %775 = vmatpush1.msra.mxu0 0.0
        %776 = vmatprep.subr.mxu0 0.0
        %777 = vmatpush1.msra.mxu0 0.0
        %778 = vmatprep.subr.mxu0 0.0
        %779 = vmatpush1.msra.mxu0 0.0
        %780 = vmatprep.subr.mxu0 0.0
        %781 = vmatpush1.msra.mxu0 0.0
        %782 = vmatprep.subr.mxu0 0.0
        %783 = vmatpush1.msra.mxu0 0.0
        %784 = vmatprep.subr.mxu0 0.0
        %785 = vmatpush1.msra.mxu0 %v749
        %786 = vmatprep.subr.mxu0 0.0
        %787 = vmatpush2.msra.mxu0 0.0
        %788 = vmatprep.subr.mxu0 0.0
        %789 = vmatpush2.msra.mxu0 0.0
        %790 = vmatprep.subr.mxu0 0.0
        %791 = vmatpush2.msra.mxu0 0.0
        %792 = vmatprep.subr.mxu0 0.0
        %793 = vmatpush2.msra.mxu0 0.0
        %794 = vmatprep.subr.mxu0 0.0
        %795 = vmatpush2.msra.mxu0 0.0
        %796 = vmatprep.subr.mxu0 0.0
        %797 = vmatpush2.msra.mxu0 0.0
        %798 = vmatprep.subr.mxu0 0.0
        %799 = vmatpush2.msra.mxu0 0.0
        %800 = vmatprep.subr.mxu0 0.0
        %801 = vmatpush2.msra.mxu0 0.0
        %802 = vmatprep.subr.mxu0 0.0
        %803 = vmatpush2.msra.mxu0 0.0
        %804 = vmatprep.subr.mxu0 0.0
        %805 = vmatpush2.msra.mxu0 0.0
        %806 = vmatprep.subr.mxu0 0.0
        %807 = vmatpush2.msra.mxu0 0.0
        %808 = vmatprep.subr.mxu0 0.0
        %809 = vmatpush2.msra.mxu0 0.0
        %810 = vmatprep.subr.mxu0 0.0
        %811 = vmatpush2.msra.mxu0 0.0
        %812 = vmatprep.subr.mxu0 0.0
        %813 = vmatpush2.msra.mxu0 0.0
        %814 = vmatprep.subr.mxu0 0.0
        %815 = vmatpush2.msra.mxu0 0.0
        %816 = vmatprep.subr.mxu0 0.0
        %817 = vmatpush2.msra.mxu0 0.0
        %818 = vmatprep.mubr.f32.mxu0 0.0
        %819 = vmatmul.mubr.f32.gmra.mxu0 %v752
        %v820 = vpop.f32.mrf.mxu0
        %v821 = vadd.f32 0.0, %v820
        %v822 = vpop.f32.mrf.mxu0
        %823 = vdwg.mxu0
        %824 = vrot.lane.b32.xlu0 %v318, 104
        %v825 = vpop.permute.xlu0 %824
        %826 = vrot.lane.b32.xlu0 %v318, 72
        %v827 = vpop.permute.xlu0 %826
        %v828 = vsel %vm329, %v825, 0
        %v830 = vsel %vm329, %v827, 0
        %832 = vmatprep.subr.mxu0 0.0
        %833 = vmatpush1.xpose.msra.mxu0 0.0
        %834 = vmatprep.subr.mxu0 0.0
        %835 = vmatpush1.xpose.msra.mxu0 0.0
        %836 = vmatprep.subr.mxu0 0.0
        %837 = vmatpush1.xpose.msra.mxu0 0.0
        %838 = vmatprep.subr.mxu0 0.0
        %839 = vmatpush1.xpose.msra.mxu0 0.0
        %840 = vmatprep.subr.mxu0 0.0
        %841 = vmatpush1.xpose.msra.mxu0 0.0
        %842 = vmatprep.subr.mxu0 0.0
        %843 = vmatpush1.xpose.msra.mxu0 0.0
        %844 = vmatprep.subr.mxu0 0.0
        %845 = vmatpush1.xpose.msra.mxu0 0.0
        %846 = vmatprep.subr.mxu0 0.0
        %847 = vmatpush1.xpose.msra.mxu0 0.0
        %848 = vmatprep.subr.mxu0 0.0
        %849 = vmatpush1.xpose.msra.mxu0 0.0
        %850 = vmatprep.subr.mxu0 0.0
        %851 = vmatpush1.xpose.msra.mxu0 0.0
        %852 = vmatprep.subr.mxu0 0.0
        %853 = vmatpush1.xpose.msra.mxu0 0.0
        %854 = vmatprep.subr.mxu0 0.0
        %855 = vmatpush1.xpose.msra.mxu0 0.0
        %856 = vmatprep.subr.mxu0 0.0
        %857 = vmatpush1.xpose.msra.mxu0 0.0
        %858 = vmatprep.subr.mxu0 0.0
        %859 = vmatpush1.xpose.msra.mxu0 0.0
        %860 = vmatprep.subr.mxu0 0.0
        %861 = vmatpush1.xpose.msra.mxu0 0.0
        %862 = vmatprep.subr.mxu0 0.0
        %863 = vmatpush1.xpose.msra.mxu0 %v830
        %864 = vmatprep.subr.mxu0 0.0
        %865 = vmatpush2.xpose.msra.mxu0 0.0
        %866 = vmatprep.subr.mxu0 0.0
        %867 = vmatpush2.xpose.msra.mxu0 0.0
        %868 = vmatprep.subr.mxu0 0.0
        %869 = vmatpush2.xpose.msra.mxu0 0.0
        %870 = vmatprep.subr.mxu0 0.0
        %871 = vmatpush2.xpose.msra.mxu0 0.0
        %872 = vmatprep.subr.mxu0 0.0
        %873 = vmatpush2.xpose.msra.mxu0 0.0
        %874 = vmatprep.subr.mxu0 0.0
        %875 = vmatpush2.xpose.msra.mxu0 0.0
        %876 = vmatprep.subr.mxu0 0.0
        %877 = vmatpush2.xpose.msra.mxu0 0.0
        %878 = vmatprep.subr.mxu0 0.0
        %879 = vmatpush2.xpose.msra.mxu0 0.0
        %880 = vmatprep.subr.mxu0 0.0
        %881 = vmatpush2.xpose.msra.mxu0 0.0
        %882 = vmatprep.subr.mxu0 0.0
        %883 = vmatpush2.xpose.msra.mxu0 0.0
        %884 = vmatprep.subr.mxu0 0.0
        %885 = vmatpush2.xpose.msra.mxu0 0.0
        %886 = vmatprep.subr.mxu0 0.0
        %887 = vmatpush2.xpose.msra.mxu0 0.0
        %888 = vmatprep.subr.mxu0 0.0
        %889 = vmatpush2.xpose.msra.mxu0 0.0
        %890 = vmatprep.subr.mxu0 0.0
        %891 = vmatpush2.xpose.msra.mxu0 0.0
        %892 = vmatprep.subr.mxu0 0.0
        %893 = vmatpush2.xpose.msra.mxu0 0.0
        %894 = vmatprep.subr.mxu0 0.0
        %895 = vmatpush2.xpose.msra.mxu0 0.0
        %896 = vmatprep.mubr.f32.mxu0 0.0
        %897 = vmatmul.mubr.f32.gmra.mxu0 %v828
        %v898 = vpop.f32.mrf.mxu0
        %v899 = vadd.f32 0.0, %v898
        %v900 = vpop.f32.mrf.mxu0
        %901 = vdwg.mxu0
        %v902 = vsel %vm325, %v899, -inf
        %v903 = vsel %vm329, %v902, -inf
        %904 = vmax.xlane.f32.xlu0 %v903
        %v905 = vpop.xlane.xlu0 %904
        %v906 = vsub.f32 %v902, %v905
        %v907 = vmul.f32 %v906, 1.442695
        %v908 = vpow.pop %v907
        %v909 = vsel %vm329, %v908, 0.0
        %910 = vadd.xlane.f32.xlu0 %v909
        %v911 = vpop.xlane.xlu0 %910
        %v912 = vrcp.pop %v911
        %v913 = vmul.f32 %v908, %v912
        %914 = vrot.lane.b32.xlu0 %v318, 40
        %v915 = vpop.permute.xlu0 %914
        %v918 = vsel %vm329, %v913, 0
        %920 = vmatprep.subr.mxu0 0.0
        %921 = vmatpush1.msra.mxu0 0.0
        %922 = vmatprep.subr.mxu0 0.0
        %923 = vmatpush1.msra.mxu0 0.0
        %924 = vmatprep.subr.mxu0 0.0
        %925 = vmatpush1.msra.mxu0 0.0
        %926 = vmatprep.subr.mxu0 0.0
        %927 = vmatpush1.msra.mxu0 0.0
        %928 = vmatprep.subr.mxu0 0.0
        %929 = vmatpush1.msra.mxu0 0.0
        %930 = vmatprep.subr.mxu0 0.0
        %931 = vmatpush1.msra.mxu0 0.0
        %932 = vmatprep.subr.mxu0 0.0
        %933 = vmatpush1.msra.mxu0 0.0
        %934 = vmatprep.subr.mxu0 0.0
        %935 = vmatpush1.msra.mxu0 0.0
        %936 = vmatprep.subr.mxu0 0.0
        %937 = vmatpush1.msra.mxu0 0.0
        %938 = vmatprep.subr.mxu0 0.0
        %939 = vmatpush1.msra.mxu0 0.0
        %940 = vmatprep.subr.mxu0 0.0
        %941 = vmatpush1.msra.mxu0 0.0
        %942 = vmatprep.subr.mxu0 0.0
        %943 = vmatpush1.msra.mxu0 0.0
        %944 = vmatprep.subr.mxu0 0.0
        %945 = vmatpush1.msra.mxu0 0.0
        %946 = vmatprep.subr.mxu0 0.0
        %947 = vmatpush1.msra.mxu0 0.0
        %948 = vmatprep.subr.mxu0 0.0
        %949 = vmatpush1.msra.mxu0 0.0
        %950 = vmatprep.subr.mxu0 0.0
        %951 = vmatpush1.msra.mxu0 %v915
        %952 = vmatprep.subr.mxu0 0.0
        %953 = vmatpush2.msra.mxu0 0.0
        %954 = vmatprep.subr.mxu0 0.0
        %955 = vmatpush2.msra.mxu0 0.0
        %956 = vmatprep.subr.mxu0 0.0
        %957 = vmatpush2.msra.mxu0 0.0
        %958 = vmatprep.subr.mxu0 0.0
        %959 = vmatpush2.msra.mxu0 0.0
        %960 = vmatprep.subr.mxu0 0.0
        %961 = vmatpush2.msra.mxu0 0.0
        %962 = vmatprep.subr.mxu0 0.0
        %963 = vmatpush2.msra.mxu0 0.0
        %964 = vmatprep.subr.mxu0 0.0
        %965 = vmatpush2.msra.mxu0 0.0
        %966 = vmatprep.subr.mxu0 0.0
        %967 = vmatpush2.msra.mxu0 0.0
        %968 = vmatprep.subr.mxu0 0.0
        %969 = vmatpush2.msra.mxu0 0.0
        %970 = vmatprep.subr.mxu0 0.0
        %971 = vmatpush2.msra.mxu0 0.0
        %972 = vmatprep.subr.mxu0 0.0
        %973 = vmatpush2.msra.mxu0 0.0
        %974 = vmatprep.subr.mxu0 0.0
        %975 = vmatpush2.msra.mxu0 0.0
        %976 = vmatprep.subr.mxu0 0.0
        %977 = vmatpush2.msra.mxu0 0.0
        %978 = vmatprep.subr.mxu0 0.0
        %979 = vmatpush2.msra.mxu0 0.0
        %980 = vmatprep.subr.mxu0 0.0
        %981 = vmatpush2.msra.mxu0 0.0
        %982 = vmatprep.subr.mxu0 0.0
        %983 = vmatpush2.msra.mxu0 0.0
        %984 = vmatprep.mubr.f32.mxu0 0.0
        %985 = vmatmul.mubr.f32.gmra.mxu0 %v918
        %v986 = vpop.f32.mrf.mxu0
        %v987 = vadd.f32 0.0, %v986
        %v988 = vpop.f32.mrf.mxu0
        %989 = vdwg.mxu0
        %991 = vrot.lane.b32.xlu0 %v655, 8
        %v992 = vpop.permute.xlu0 %991
        %995 = vrot.lane.b32.xlu0 %v821, 16
        %v996 = vpop.permute.xlu0 %995
        %999 = vrot.lane.b32.xlu0 %v987, 24
        %v1000 = vpop.permute.xlu0 %999
        %v1002 = vsel %vm329, %v489, %v992
        %vm1003 = vcmask 130048
        %v1004 = vsel %vm1003, %v1002, %v996
        %vm1005 = vcmask 195584
        %v1006 = vsel %vm1005, %v1004, %v1000
        %v1007 = vld [vmem:[#allocation7] sm:$0xff]
        %v1008 = vld [vmem:[#allocation7 + $0x8] sm:$0xff]
        %v1009 = vld [vmem:[#allocation7 + $0x10] sm:$0xff]
        %v1010 = vld [vmem:[#allocation7 + $0x18] sm:$0xff]
        %v1011 = vld [vmem:[%s3] sm:$0x1]
        %v1013 = vlaneseq
        %v1014 = vshrl.u32 %v1013, 7
        %v1015 = vsub.s32 0, %v1014
        %v1016 = vrot.slane %v1011, %v1015
        %v1019 = vsel %vm247, %v1006, 0
        %1021 = vmatprep.subr.mxu0 0.0
        %1022 = vmatpush1.msra.mxu0 0.0
        %1023 = vmatprep.subr.mxu0 0.0
        %1024 = vmatpush1.msra.mxu0 0.0
        %1025 = vmatprep.subr.mxu0 0.0
        %1026 = vmatpush1.msra.mxu0 0.0
        %1027 = vmatprep.subr.mxu0 0.0
        %1028 = vmatpush1.msra.mxu0 0.0
        %1029 = vmatprep.subr.mxu0 0.0
        %1030 = vmatpush1.msra.mxu0 0.0
        %1031 = vmatprep.subr.mxu0 0.0
        %1032 = vmatpush1.msra.mxu0 0.0
        %1033 = vmatprep.subr.mxu0 0.0
        %1034 = vmatpush1.msra.mxu0 0.0
        %1035 = vmatprep.subr.mxu0 0.0
        %1036 = vmatpush1.msra.mxu0 0.0
        %1037 = vmatprep.subr.mxu0 0.0
        %1038 = vmatpush1.msra.mxu0 0.0
        %1039 = vmatprep.subr.mxu0 0.0
        %1040 = vmatpush1.msra.mxu0 0.0
        %1041 = vmatprep.subr.mxu0 0.0
        %1042 = vmatpush1.msra.mxu0 0.0
        %1043 = vmatprep.subr.mxu0 0.0
        %1044 = vmatpush1.msra.mxu0 0.0
        %1045 = vmatprep.subr.mxu0 0.0
        %1046 = vmatpush1.msra.mxu0 %v1010
        %1047 = vmatprep.subr.mxu0 0.0
        %1048 = vmatpush1.msra.mxu0 %v1009
        %1049 = vmatprep.subr.mxu0 0.0
        %1050 = vmatpush1.msra.mxu0 %v1008
        %1051 = vmatprep.subr.mxu0 0.0
        %1052 = vmatpush1.msra.mxu0 %v1007
        %1053 = vmatprep.subr.mxu0 0.0
        %1054 = vmatpush2.msra.mxu0 0.0
        %1055 = vmatprep.subr.mxu0 0.0
        %1056 = vmatpush2.msra.mxu0 0.0
        %1057 = vmatprep.subr.mxu0 0.0
        %1058 = vmatpush2.msra.mxu0 0.0
        %1059 = vmatprep.subr.mxu0 0.0
        %1060 = vmatpush2.msra.mxu0 0.0
        %1061 = vmatprep.subr.mxu0 0.0
        %1062 = vmatpush2.msra.mxu0 0.0
        %1063 = vmatprep.subr.mxu0 0.0
        %1064 = vmatpush2.msra.mxu0 0.0
        %1065 = vmatprep.subr.mxu0 0.0
        %1066 = vmatpush2.msra.mxu0 0.0
        %1067 = vmatprep.subr.mxu0 0.0
        %1068 = vmatpush2.msra.mxu0 0.0
        %1069 = vmatprep.subr.mxu0 0.0
        %1070 = vmatpush2.msra.mxu0 0.0
        %1071 = vmatprep.subr.mxu0 0.0
        %1072 = vmatpush2.msra.mxu0 0.0
        %1073 = vmatprep.subr.mxu0 0.0
        %1074 = vmatpush2.msra.mxu0 0.0
        %1075 = vmatprep.subr.mxu0 0.0
        %1076 = vmatpush2.msra.mxu0 0.0
        %1077 = vmatprep.subr.mxu0 0.0
        %1078 = vmatpush2.msra.mxu0 0.0
        %1079 = vmatprep.subr.mxu0 0.0
        %1080 = vmatpush2.msra.mxu0 0.0
        %1081 = vmatprep.subr.mxu0 0.0
        %1082 = vmatpush2.msra.mxu0 0.0
        %1083 = vmatprep.subr.mxu0 0.0
        %1084 = vmatpush2.msra.mxu0 0.0
        %1085 = vmatprep.mubr.f32.mxu0 0.0
        %1086 = vmatmul.mubr.f32.gmra.mxu0 %v1019
        %v1087 = vpop.f32.mrf.mxu0
        %v1088 = vadd.f32 %v1016, %v1087
        %v1089 = vpop.f32.mrf.mxu0
        %1090 = vdwg.mxu0
        %1091 = vst [vmem:[%s241] sm:$0xff] %v1088
        %s1092 = sand.u32 %s119, 1
        %s1093 = scalar_lea.sflag [#allocation4], %s1092
        %s1094 = sand.u32 %s119, 1
        %s1095 = smul.addr %s1094, 8
        %s1096 = scalar_lea.vmem [#allocation8], %s1095
        // Predicated region
        $region49: #{tpu_custom_call.1} parent=35 // pred_check
          %p1097 = pneg %p129
        $region50: #{tpu_custom_call.1} parent=35 // pred_check_branch
          %1099 = sbr.rel (%p1097) target = $region52
        $region51: #{tpu_custom_call.1} parent=35 // pred_region
          %s1101 = ssub.s32 128, 128
          %1102 = vsyncadd %s1093, %s1101
          %s1103 = smul.addr %s22, 128
          %s1104 = scalar_lea.hbm %s4, %s1103
          %s1106 = sshll.u32 %s1096, 4
          %s1107 = int_to_ptr.vmem [resolvable:$true] %s1106
          %1109 = dma.vmem_to_hbm [thread:$0]  %s1107, 128, %s1104, %s1093
        $region52: #{tpu_custom_call.1} parent=35 // pred_fallthru
          _
      $region36: #{tpu_custom_call.1} parent=5 // pred_fallthru
        _
      %p1110 = scmp.le.s32.totalorder 2, %s17
      // Predicated region
      $region53: #{tpu_custom_call.1} parent=5 // pred_check
        %p1111 = pneg %p1110
      $region54: #{tpu_custom_call.1} parent=5 // pred_check_branch
        %1113 = sbr.rel (%p1111) target = $region56
      $region55: #{tpu_custom_call.1} parent=5 // pred_region
        %s1114 = ssub.s32 %s17, 2
        // Predicated region
        $region57: #{tpu_custom_call.1} parent=55 // pred_check
          %p1115 = pneg %p135
        $region58: #{tpu_custom_call.1} parent=55 // pred_check_branch
          %1117 = sbr.rel (%p1115) target = $region60
        $region59: #{tpu_custom_call.1} parent=55 // pred_region
          %s1118 = sand.u32 %s120, 1
          %s1119 = scalar_lea.sflag [#allocation4], %s1118
          %s1120 = sand.u32 %s120, 1
          %s1121 = smul.addr %s1120, 8
          %s1122 = scalar_lea.vmem [#allocation8], %s1121
          %1123 = dma.done %s1119, 128
        $region60: #{tpu_custom_call.1} parent=55 // pred_fallthru
          _
      $region56: #{tpu_custom_call.1} parent=5 // pred_fallthru
        _
    $region6: #{tpu_custom_call.1} parent=1 // loop_footer
      %s21 = sadd.s32 1, %s17
    $region7: #{tpu_custom_call.1} parent=1 // loop_footer_branch
      %16 = sbr.rel target = $region3
    $region8: #{tpu_custom_call.1} parent=1 // loop_exit
      _
    %1124 = vsyncpa [#allocation3], 1
    %s1125 = scalar_lea.sflag [#allocation3], 1
    %1126 = vsyncpa %s1125, 1
    %1127 = vsyncpa [#allocation6], 1
    %1128 = vsyncpa [#allocation4], 1
    %s1129 = scalar_lea.sflag [#allocation4], 1
    %1130 = vsyncpa %s1129, 1

</llo_original>
